<compile_context>
chip_gen: v7x
topology: tpu7x:2x2x1
jax: 0.10.0
libtpu: 0.0.40
codegen_flags: <defaults>
</compile_context>

<pallas_src>
from functools import partial

import numpy as np
import jax
import jax.numpy as jnp
from jax.experimental import pallas as pl
from jax.experimental.pallas import tpu as pltpu


# ----------------------------------------------------------------------------
# Torch-equivalent helpers (host side, pure python / numpy / jnp layout ops)
# ----------------------------------------------------------------------------
def get_window_size(x_size, window_size, shift_size=None):
    use_window_size = list(window_size)
    use_shift_size = list(shift_size) if shift_size is not None else None
    for i in range(len(x_size)):
        if x_size[i] <= window_size[i]:
            use_window_size[i] = x_size[i]
            if shift_size is not None:
                use_shift_size[i] = 0
    if shift_size is None:
        return tuple(use_window_size)
    return tuple(use_window_size), tuple(use_shift_size)


def _window_partition(x, ws):
    """(B, D, H, W, C) -> (B*nW, prod(ws), C).  Works for numpy and jnp."""
    B, D, H, W, C = x.shape
    x = x.reshape(B, D // ws[0], ws[0], H // ws[1], ws[1], W // ws[2], ws[2], C)
    return x.transpose(0, 1, 3, 5, 2, 4, 6, 7).reshape(-1, ws[0] * ws[1] * ws[2], C)


def _window_reverse(windows, ws, B, D, H, W):
    x = windows.reshape(B, D // ws[0], H // ws[1], W // ws[2], ws[0], ws[1], ws[2], -1)
    return x.transpose(0, 1, 4, 2, 5, 3, 6, 7).reshape(B, D, H, W, -1)


def compute_mask_np(Dp, Hp, Wp, window_size, shift_size):
    """Replicates torch compute_mask: (nW, N, N) with 0 / -100 entries."""
    img_mask = np.zeros((1, Dp, Hp, Wp, 1), np.float32)
    cnt = 0
    for d in (slice(-window_size[0]), slice(-window_size[0], -shift_size[0]),
              slice(-shift_size[0], None)):
        for h in (slice(-window_size[1]), slice(-window_size[1], -shift_size[1]),
                  slice(-shift_size[1], None)):
            for w in (slice(-window_size[2]), slice(-window_size[2], -shift_size[2]),
                      slice(-shift_size[2], None)):
                img_mask[:, d, h, w, :] = cnt
                cnt += 1
    mask_windows = _window_partition(img_mask, window_size)[:, :, 0]      # (nW, N)
    attn = mask_windows[:, None, :] - mask_windows[:, :, None]            # (nW, N, N)
    attn = np.where(attn != 0, np.float32(-100.0), np.float32(0.0))
    return jnp.asarray(attn, jnp.float32)


def _relative_position_index(window_size):
    ws = window_size
    coords = np.stack(np.meshgrid(np.arange(ws[0]), np.arange(ws[1]),
                                  np.arange(ws[2]), indexing="ij"))
    coords_flatten = coords.reshape(3, -1)
    rel = coords_flatten[:, :, None] - coords_flatten[:, None, :]
    rel = rel.transpose(1, 2, 0).astype(np.int64)
    rel[:, :, 0] += ws[0] - 1
    rel[:, :, 1] += ws[1] - 1
    rel[:, :, 2] += ws[2] - 1
    rel[:, :, 0] *= (2 * ws[1] - 1) * (2 * ws[2] - 1)
    rel[:, :, 1] *= (2 * ws[2] - 1)
    return rel.sum(-1)                                                    # (N, N)


# ----------------------------------------------------------------------------
# Tiling helpers
# ----------------------------------------------------------------------------
def _row_plan(rows, width_elems, target=512, budget_bytes=6 << 20):
    """Pick a row tile TR (multiple of 8, <= target, <= VMEM budget) and the
    padded row count.  Never degenerates to TR == rows for huge `rows`."""
    cap = budget_bytes // max(4 * width_elems, 1)
    cap = max(8, cap - cap % 8)
    tgt = max(8, min(target, cap))
    if rows <= tgt:
        return rows, rows                       # single full block (exempt from 8-rule)
    t = tgt
    while t >= 8:
        if rows % t == 0:
            return t, rows
        t -= 8
    rp = ((rows + tgt - 1) // tgt) * tgt        # pad-and-slice fallback
    return tgt, rp


def _choose_windows_per_step(nW, N, C, num_heads, w_itemsize, budget_bytes=8 << 20):
    """Largest divisor of nW whose estimated per-step VMEM footprint fits."""
    best = 1
    for d in range(1, nW + 1):
        if nW % d:
            continue
        act = d * N * C * 4
        est = (4 * act                            # x in + out tiles, double buffered
               + 2 * d * N * N * 4                # shift-mask tile, double buffered
               + d * N * 3 * C * 4                # fused qkv intermediate
               + 4 * d * N * N * 4                # score / exp / prob temporaries
               + 2 * act                          # concatenated context + misc
               + 2 * 4 * C * C * w_itemsize       # qkv + proj weights, double buffered
               + 2 * num_heads * N * N * 4)       # relative-position bias
        if est <= budget_bytes:
            best = d
    return best


# ----------------------------------------------------------------------------
# In-kernel math helpers
# ----------------------------------------------------------------------------
_SQRT_HALF = 0.7071067811865476


def _erf_approx(x, fast_math):
    # Abramowitz & Stegun 7.1.26 (|err| <= 1.5e-7), elementwise ops only.
    a1, a2, a3, a4, a5 = 0.254829592, -0.284496736, 1.421413741, -1.453152027, 1.061405429
    p = 0.3275911
    sign = jnp.where(x >= 0, 1.0, -1.0)
    ax = jnp.abs(x)
    u = 1.0 + p * ax
    t = pl.reciprocal(u, approx=True) if fast_math else 1.0 / u
    poly = ((((a5 * t + a4) * t + a3) * t + a2) * t + a1) * t
    return sign * (1.0 - poly * jnp.exp(-ax * ax))


def _gelu(x, fast_math):
    # Exact-erf GELU (matches torch nn.GELU default) via polynomial erf.
    return 0.5 * x * (1.0 + _erf_approx(x * _SQRT_HALF, fast_math))


# ----------------------------------------------------------------------------
# Kernel 1: row-tiled LayerNorm (norm1 of the FIRST block only; later blocks
# get their norm1 fused into the previous block's part-2 kernel).
# ----------------------------------------------------------------------------
def _layernorm_kernel(x_ref, g_ref, b_ref, o_ref, *, eps):
    x = x_ref[...]
    mu = jnp.mean(x, axis=-1, keepdims=True)
    xc = x - mu
    var = jnp.mean(xc * xc, axis=-1, keepdims=True)
    o_ref[...] = ((xc * jax.lax.rsqrt(var + eps)) * g_ref[...] + b_ref[...]).astype(o_ref.dtype)


def pallas_layernorm(x, gamma, beta, eps=1e-5):
    R, C = x.shape
    TR, Rp = _row_plan(R, 3 * C)
    xin = jnp.pad(x, ((0, Rp - R), (0, 0))) if Rp != R else x
    out = pl.pallas_call(
        partial(_layernorm_kernel, eps=eps),
        out_shape=jax.ShapeDtypeStruct((Rp, C), jnp.float32),
        grid=(Rp // TR,),
        in_specs=[
            pl.BlockSpec((TR, C), lambda i: (i, 0)),
            pl.BlockSpec((1, C), lambda i: (0, 0)),
            pl.BlockSpec((1, C), lambda i: (0, 0)),
        ],
        out_specs=pl.BlockSpec((TR, C), lambda i: (i, 0)),
        compiler_params=pltpu.CompilerParams(dimension_semantics=("parallel",)),
    )(xin, gamma.reshape(1, C), beta.reshape(1, C))
    return out[:R] if Rp != R else out


# ----------------------------------------------------------------------------
# Kernel 2: fused window attention.
#   One grid step = WG windows.  QKV projection is one lane-dense matmul with
#   the QK scale folded into the Q columns; per-head score/softmax/PV stay
#   small; the heads are concatenated and projected by a single (C,C) matmul.
# ----------------------------------------------------------------------------
def _win_attn_kernel(*refs, num_heads, has_mask, fast_math):
    if has_mask:
        (x_ref, wqkv_ref, bqkv_ref, bias_ref, mask_ref, wo_ref, bo_ref, o_ref) = refs
    else:
        (x_ref, wqkv_ref, bqkv_ref, bias_ref, wo_ref, bo_ref, o_ref) = refs
        mask_ref = None

    WG, N, C = x_ref.shape
    nH = num_heads
    hd = C // nH
    cd = wqkv_ref.dtype                               # MXU operand dtype (bf16 or f32)

    x2 = x_ref[...].reshape(WG * N, C).astype(cd)
    # Fused QKV projection: one lane-dense matmul, f32 accumulation.
    qkv = (jnp.dot(x2, wqkv_ref[...], preferred_element_type=jnp.float32)
           + bqkv_ref[...])                           # (WG*N, 3C), scale folded into Q

    ctx_heads = []
    for h in range(nH):                               # small score/PV matmuls per head
        q = qkv[:, h * hd:(h + 1) * hd].reshape(WG, N, hd)
        k = qkv[:, C + h * hd:C + (h + 1) * hd].reshape(WG, N, hd)
        v = qkv[:, 2 * C + h * hd:2 * C + (h + 1) * hd].reshape(WG, N, hd)

        s = jnp.einsum("wqd,wkd->wqk", q.astype(cd), k.astype(cd),
                       preferred_element_type=jnp.float32)
        s = s + bias_ref[h][None, :, :]               # relative position bias (f32)
        if has_mask:
            s = s + mask_ref[...]                     # (WG, N, N) shift mask (f32)

        s = s - jnp.max(s, axis=-1, keepdims=True)
        e = jnp.exp(s)
        denom = jnp.sum(e, axis=-1, keepdims=True)
        p = e * pl.reciprocal(denom, approx=fast_math)

        ctx_heads.append(jnp.einsum("wqk,wkd->wqd", p.astype(cd), v.astype(cd),
                                    preferred_element_type=jnp.float32))

    ctx = jnp.concatenate(ctx_heads, axis=-1).reshape(WG * N, C)   # concat heads
    out = (jnp.dot(ctx.astype(cd), wo_ref[...], preferred_element_type=jnp.float32)
           + bo_ref[...])                             # single (C,C) output projection
    o_ref[...] = out.reshape(WG, N, C).astype(o_ref.dtype)


def pallas_window_attention(x_windows, wqkv, bqkv, bias, wo, bo, mask,
                            *, num_heads, nW, fast_math):
    Bn, N, C = x_windows.shape
    has_mask = mask is not None
    WG = _choose_windows_per_step(nW, N, C, num_heads, wqkv.dtype.itemsize)
    n_grp = nW // WG

    in_specs = [
        pl.BlockSpec((WG, N, C), lambda g: (g, 0, 0)),
        pl.BlockSpec((C, 3 * C), lambda g: (0, 0)),
        pl.BlockSpec((1, 3 * C), lambda g: (0, 0)),
        pl.BlockSpec((num_heads, N, N), lambda g: (0, 0, 0)),
    ]
    args = [x_windows, wqkv, bqkv.reshape(1, 3 * C), bias]
    if has_mask:
        in_specs.append(pl.BlockSpec((WG, N, N), lambda g: (g % n_grp, 0, 0)))
        args.append(mask)
    in_specs += [
        pl.BlockSpec((C, C), lambda g: (0, 0)),
        pl.BlockSpec((1, C), lambda g: (0, 0)),
    ]
    args += [wo, bo.reshape(1, C)]

    return pl.pallas_call(
        partial(_win_attn_kernel, num_heads=num_heads, has_mask=has_mask,
                fast_math=fast_math),
        out_shape=jax.ShapeDtypeStruct((Bn, N, C), jnp.float32),
        grid=(Bn // WG,),
        in_specs=in_specs,
        out_specs=pl.BlockSpec((WG, N, C), lambda g: (g, 0, 0)),
        compiler_params=pltpu.CompilerParams(dimension_semantics=("parallel",)),
    )(*args)


# ----------------------------------------------------------------------------
# Kernel 3: fused second half of a block:
#   x = shortcut + attn_out ; out = x + fc2(GELU(fc1(LayerNorm(x))))
#   optionally also emits LayerNorm(out) with the NEXT block's norm1 params
#   (removes the standalone norm1 pass for all blocks after the first).
# ----------------------------------------------------------------------------
def _block_part2_kernel(sc_ref, at_ref, g_ref, b_ref, w1_ref, b1_ref,
                        w2_ref, b2_ref, *rest, eps, fast_math, emit_next_ln):
    if emit_next_ln:
        gn_ref, bn_ref, o_ref, on_ref = rest
    else:
        (o_ref,) = rest
    cd = w1_ref.dtype

    x = sc_ref[...] + at_ref[...]                            # residual 1
    mu = jnp.mean(x, axis=-1, keepdims=True)
    xc = x - mu
    var = jnp.mean(xc * xc, axis=-1, keepdims=True)
    y = (xc * jax.lax.rsqrt(var + eps)) * g_ref[...] + b_ref[...]

    h = jnp.dot(y.astype(cd), w1_ref[...], preferred_element_type=jnp.float32) + b1_ref[...]
    h = _gelu(h, fast_math)
    m = jnp.dot(h.astype(cd), w2_ref[...], preferred_element_type=jnp.float32) + b2_ref[...]

    out = x + m                                              # residual 2
    o_ref[...] = out.astype(o_ref.dtype)

    if emit_next_ln:                                         # fused norm1 of next block
        mu2 = jnp.mean(out, axis=-1, keepdims=True)
        oc = out - mu2
        var2 = jnp.mean(oc * oc, axis=-1, keepdims=True)
        on_ref[...] = ((oc * jax.lax.rsqrt(var2 + eps)) * gn_ref[...]
                       + bn_ref[...]).astype(on_ref.dtype)


def pallas_block_part2(shortcut, attn_out, g2, b2, w1, b1m, w2, b2m,
                       *, next_ln=None, eps=1e-5, fast_math=True):
    R, C = shortcut.shape
    Hd = w1.shape[1]
    TR, Rp = _row_plan(R, Hd + 6 * C)
    sc, at = shortcut, attn_out
    if Rp != R:
        pad = ((0, Rp - R), (0, 0))
        sc = jnp.pad(sc, pad)
        at = jnp.pad(at, pad)
    emit = next_ln is not None

    in_specs = [
        pl.BlockSpec((TR, C), lambda i: (i, 0)),
        pl.BlockSpec((TR, C), lambda i: (i, 0)),
        pl.BlockSpec((1, C), lambda i: (0, 0)),
        pl.BlockSpec((1, C), lambda i: (0, 0)),
        pl.BlockSpec((C, Hd), lambda i: (0, 0)),
        pl.BlockSpec((1, Hd), lambda i: (0, 0)),
        pl.BlockSpec((Hd, C), lambda i: (0, 0)),
        pl.BlockSpec((1, C), lambda i: (0, 0)),
    ]
    args = [sc, at, g2.reshape(1, C), b2.reshape(1, C), w1, b1m.reshape(1, Hd),
            w2, b2m.reshape(1, C)]

    if emit:
        gn, bn = next_ln
        in_specs += [pl.BlockSpec((1, C), lambda i: (0, 0)),
                     pl.BlockSpec((1, C), lambda i: (0, 0))]
        args += [gn.reshape(1, C), bn.reshape(1, C)]
        out_shape = (jax.ShapeDtypeStruct((Rp, C), jnp.float32),
                     jax.ShapeDtypeStruct((Rp, C), jnp.float32))
        out_specs = (pl.BlockSpec((TR, C), lambda i: (i, 0)),
                     pl.BlockSpec((TR, C), lambda i: (i, 0)))
    else:
        out_shape = jax.ShapeDtypeStruct((Rp, C), jnp.float32)
        out_specs = pl.BlockSpec((TR, C), lambda i: (i, 0))

    res = pl.pallas_call(
        partial(_block_part2_kernel, eps=eps, fast_math=fast_math, emit_next_ln=emit),
        out_shape=out_shape,
        grid=(Rp // TR,),
        in_specs=in_specs,
        out_specs=out_specs,
        compiler_params=pltpu.CompilerParams(dimension_semantics=("parallel",)),
    )(*args)

    if emit:
        out, ln_next = res
        if Rp != R:
            out, ln_next = out[:R], ln_next[:R]
        return out, ln_next
    out = res[:R] if Rp != R else res
    return out, None


# ----------------------------------------------------------------------------
# Module: BasicLayer (Pallas)
# ----------------------------------------------------------------------------
class BasicLayerPallas:
    def __init__(self, dim, depth, num_heads, window_size=(1, 7, 7),
                 mlp_ratio=4.0, qkv_bias=False, qk_scale=None, *, key):
        self.dim = dim
        self.depth = depth
        self.num_heads = num_heads
        self.window_size = tuple(window_size)
        self.shift_size = tuple(i // 2 for i in window_size)
        head_dim = dim // num_heads
        self.scale = float(qk_scale) if qk_scale is not None else head_dim ** (-0.5)
        self.mlp_hidden = int(dim * mlp_ratio)
        self._rel_index = _relative_position_index(self.window_size)
        self._N_full = window_size[0] * window_size[1] * window_size[2]
        n_bias = ((2 * window_size[0] - 1) * (2 * window_size[1] - 1)
                  * (2 * window_size[2] - 1))

        # TODO(synk): Dropout / DropPath / attn_drop are identity (p = 0.0, inference).
        self.blocks = []
        block_keys = jax.random.split(key, depth)
        for i in range(depth):
            ks = jax.random.split(block_keys[i], 13)

            def nrm(k, shape, s=0.02):
                return jax.random.normal(k, shape, jnp.float32) * s

            wqkv = nrm(ks[0], (dim, 3 * dim))
            bqkv = nrm(ks[1], (3 * dim,)) if qkv_bias else jnp.zeros((3 * dim,), jnp.float32)
            wproj = nrm(ks[2], (dim, dim))
            bproj = nrm(ks[3], (dim,))
            bias_table = nrm(ks[4], (n_bias, num_heads))
            g1 = 1.0 + nrm(ks[5], (dim,));  b1 = nrm(ks[6], (dim,))
            g2 = 1.0 + nrm(ks[7], (dim,));  b2 = nrm(ks[8], (dim,))
            w1 = nrm(ks[9], (dim, self.mlp_hidden)); b1m = nrm(ks[10], (self.mlp_hidden,))
            w2 = nrm(ks[11], (self.mlp_hidden, dim)); b2m = nrm(ks[12], (dim,))

            # Fold qk scale into the Q columns of the fused qkv weight / bias.
            wqkv_scaled = jnp.concatenate([wqkv[:, :dim] * self.scale, wqkv[:, dim:]], axis=1)
            bqkv_scaled = jnp.concatenate([bqkv[:dim] * self.scale, bqkv[dim:]])

            # Precompute relative-position bias (nH, Nf, Nf) for the full window.
            Nf = self._N_full
            idx = jnp.asarray(self._rel_index.reshape(-1))
            bias_full = bias_table[idx].reshape(Nf, Nf, num_heads).transpose(2, 0, 1)

            self.blocks.append(dict(
                shift=(0, 0, 0) if i % 2 == 0 else self.shift_size,
                wqkv=wqkv, bqkv=bqkv, wproj=wproj, bproj=bproj,
                wqkv_scaled=wqkv_scaled, bqkv_scaled=bqkv_scaled,
                bias_table=bias_table, bias_full=bias_full,
                g1=g1, b1=b1, g2=g2, b2=b2,
                w1=w1, b1m=b1m, w2=w2, b2m=b2m,
            ))

    # ----- helpers -----------------------------------------------------------
    def _get_bias(self, p, N):
        if N == self._N_full:
            return p["bias_full"]
        idx = jnp.asarray(self._rel_index[:N, :N].reshape(-1))
        return p["bias_table"][idx].reshape(N, N, self.num_heads).transpose(2, 0, 1)

    # ----- one SwinTransformerBlock3D ----------------------------------------
    def _block_forward(self, p, x, mask_matrix, xn_pre, next_p, cd, fast_math):
        B, D, H, W, C = x.shape
        window_size, shift_size = get_window_size((D, H, W), self.window_size, p["shift"])
        shortcut = x

        # norm1: either reuse the LN fused into the previous block's part-2
        # kernel, or (first block) run the standalone row-tiled LN kernel.
        if xn_pre is not None:
            xn = xn_pre
        else:
            xn = pallas_layernorm(x.reshape(-1, C), p["g1"], p["b1"]).reshape(B, D, H, W, C)

        pad_d1 = (window_size[0] - D % window_size[0]) % window_size[0]
        pad_b = (window_size[1] - H % window_size[1]) % window_size[1]
        pad_r = (window_size[2] - W % window_size[2]) % window_size[2]
        xp = jnp.pad(xn, ((0, 0), (0, pad_d1), (0, pad_b), (0, pad_r), (0, 0)))
        _, Dp, Hp, Wp, _ = xp.shape

        shifted_blk = any(i > 0 for i in shift_size)
        if shifted_blk:
            xs = jnp.roll(xp, shift=(-shift_size[0], -shift_size[1], -shift_size[2]),
                          axis=(1, 2, 3))
            attn_mask = mask_matrix
        else:
            xs = xp
            attn_mask = None          # no-mask kernel variant: no mask DMA / add

        # TODO(synk): window partition/reverse + pad/roll are XLA layout ops; folding
        # the window cut into the attention BlockSpec is a further (v5e) optimization.
        x_windows = _window_partition(xs, window_size)       # (B*nW, N, C)
        nW = x_windows.shape[0] // B
        N = x_windows.shape[1]
        bias = self._get_bias(p, N)

        attn_windows = pallas_window_attention(
            x_windows, p["wqkv_scaled"].astype(cd), p["bqkv_scaled"], bias,
            p["wproj"].astype(cd), p["bproj"], attn_mask,
            num_heads=self.num_heads, nW=nW, fast_math=fast_math)

        attn_windows = attn_windows.reshape((-1,) + tuple(window_size) + (C,))
        xs = _window_reverse(attn_windows, window_size, B, Dp, Hp, Wp)
        if shifted_blk:
            xo = jnp.roll(xs, shift=shift_size, axis=(1, 2, 3))
        else:
            xo = xs
        if pad_d1 > 0 or pad_b > 0 or pad_r > 0:
            xo = xo[:, :D, :H, :W, :]

        # fused: x = shortcut + attn ; out = x + mlp(norm2(x)) ; [ln1_next(out)]
        next_ln = (next_p["g1"], next_p["b1"]) if next_p is not None else None
        out2d, ln_next = pallas_block_part2(
            shortcut.reshape(-1, C), xo.reshape(-1, C),
            p["g2"], p["b2"], p["w1"].astype(cd), p["b1m"], p["w2"].astype(cd), p["b2m"],
            next_ln=next_ln, fast_math=fast_math)
        out = out2d.reshape(B, D, H, W, C)
        ln_next = ln_next.reshape(B, D, H, W, C) if ln_next is not None else None
        return out, ln_next

    # ----- BasicLayer forward -------------------------------------------------
    def __call__(self, x, compute_dtype=jnp.bfloat16, fast_math=True):
        """x: (B, C, D, H, W) -> (B, C, D, H, W)."""
        B, C, D, H, W = x.shape
        window_size, shift_size = get_window_size((D, H, W), self.window_size,
                                                  self.shift_size)
        x = jnp.transpose(x, (0, 2, 3, 4, 1))                # b c d h w -> b d h w c
        Dp = int(np.ceil(D / window_size[0])) * window_size[0]
        Hp = int(np.ceil(H / window_size[1])) * window_size[1]
        Wp = int(np.ceil(W / window_size[2])) * window_size[2]
        attn_mask = compute_mask_np(Dp, Hp, Wp, window_size, shift_size)

        xn_pre = None
        for bi, p in enumerate(self.blocks):
            next_p = self.blocks[bi + 1] if bi + 1 < self.depth else None
            x, xn_pre = self._block_forward(p, x, attn_mask, xn_pre, next_p,
                                            compute_dtype, fast_math)
        x = x.reshape(B, D, H, W, -1)
        # TODO(synk): downsample (PatchMerging) is None in this BasicLayer config.
        return jnp.transpose(x, (0, 4, 1, 2, 3))             # b d h w c -> b c d h w


# ----------------------------------------------------------------------------
# Pure-JAX reference (mirrors the torch forward exactly) — verification only.
# ----------------------------------------------------------------------------
def _ln_ref(x, g, b, eps=1e-5):
    mu = x.mean(-1, keepdims=True)
    var = ((x - mu) ** 2).mean(-1, keepdims=True)
    return (x - mu) / jnp.sqrt(var + eps) * g + b


def _ref_window_attention(xw, p, bias, mask, num_heads, scale):
    B_, N, C = xw.shape
    hd = C // num_heads
    qkv = xw @ p["wqkv"] + p["bqkv"]
    qkv = qkv.reshape(B_, N, 3, num_heads, hd).transpose(2, 0, 3, 1, 4)
    q, k, v = qkv[0] * scale, qkv[1], qkv[2]
    attn = jnp.einsum("bhqd,bhkd->bhqk", q, k) + bias[None, :, :, :]
    if mask is not None:
        nW = mask.shape[0]
        attn = attn.reshape(B_ // nW, nW, num_heads, N, N) + mask[None, :, None, :, :]
        attn = attn.reshape(B_, num_heads, N, N)
    attn = jax.nn.softmax(attn, axis=-1)
    out = jnp.einsum("bhqk,bhkd->bhqd", attn, v).transpose(0, 2, 1, 3).reshape(B_, N, C)
    return out @ p["wproj"] + p["bproj"]


def _ref_block(layer, p, x, mask_matrix):
    B, D, H, W, C = x.shape
    window_size, shift_size = get_window_size((D, H, W), layer.window_size, p["shift"])
    shortcut = x
    xn = _ln_ref(x, p["g1"], p["b1"])
    pad_d1 = (window_size[0] - D % window_size[0]) % window_size[0]
    pad_b = (window_size[1] - H % window_size[1]) % window_size[1]
    pad_r = (window_size[2] - W % window_size[2]) % window_size[2]
    xp = jnp.pad(xn, ((0, 0), (0, pad_d1), (0, pad_b), (0, pad_r), (0, 0)))
    _, Dp, Hp, Wp, _ = xp.shape
    if any(i > 0 for i in shift_size):
        xs = jnp.roll(xp, shift=(-shift_size[0], -shift_size[1], -shift_size[2]),
                      axis=(1, 2, 3))
        attn_mask = mask_matrix
    else:
        xs = xp
        attn_mask = None
    xw = _window_partition(xs, window_size)
    N = xw.shape[1]
    bias = p["bias_table"][jnp.asarray(layer._rel_index[:N, :N].reshape(-1))]
    bias = bias.reshape(N, N, layer.num_heads).transpose(2, 0, 1)
    aw = _ref_window_attention(xw, p, bias, attn_mask, layer.num_heads, layer.scale)
    aw = aw.reshape((-1,) + tuple(window_size) + (C,))
    xs = _window_reverse(aw, window_size, B, Dp, Hp, Wp)
    if any(i > 0 for i in shift_size):
        xo = jnp.roll(xs, shift=shift_size, axis=(1, 2, 3))
    else:
        xo = xs
    if pad_d1 > 0 or pad_b > 0 or pad_r > 0:
        xo = xo[:, :D, :H, :W, :]
    x = shortcut + xo
    y = _ln_ref(x, p["g2"], p["b2"])
    h = jax.nn.gelu(y @ p["w1"] + p["b1m"], approximate=False)
    return x + (h @ p["w2"] + p["b2m"])


def reference_forward(layer, x):
    B, C, D, H, W = x.shape
    window_size, shift_size = get_window_size((D, H, W), layer.window_size,
                                              layer.shift_size)
    x = jnp.transpose(x, (0, 2, 3, 4, 1))
    Dp = int(np.ceil(D / window_size[0])) * window_size[0]
    Hp = int(np.ceil(H / window_size[1])) * window_size[1]
    Wp = int(np.ceil(W / window_size[2])) * window_size[2]
    attn_mask = compute_mask_np(Dp, Hp, Wp, window_size, shift_size)
    for p in layer.blocks:
        x = _ref_block(layer, p, x, attn_mask)
    x = x.reshape(B, D, H, W, -1)
    return jnp.transpose(x, (0, 4, 1, 2, 3))


# ----------------------------------------------------------------------------
if __name__ == "__main__":
    # Small, consistent config: dim=32, 4 heads, depth=2 (one plain + one
    # shifted block), window (2,4,4) -> N=32 tokens/window, nW=8 windows/image.
    B, C, D, H, W = 2, 32, 4, 8, 8
    depth, num_heads = 2, 4
    window_size = (2, 4, 4)

    root = jax.random.PRNGKey(0)
    k_params, k_x = jax.random.split(root)

    layer = BasicLayerPallas(dim=C, depth=depth, num_heads=num_heads,
                             window_size=window_size, mlp_ratio=4.0,
                             qkv_bias=True, key=k_params)

    x = jax.random.normal(k_x, (B, C, D, H, W), jnp.float32)
    y_ref = reference_forward(layer, x)

    # 1) Exact-precision path (f32 MXU operands, exact reciprocals): verifies
    #    the kernel math against the reference at tight tolerance.
    y32 = layer(x, compute_dtype=jnp.float32, fast_math=False)
    jax.block_until_ready(y32)
    assert y32.shape == (B, C, D, H, W)
    err32 = float(jnp.max(jnp.abs(y32 - y_ref)))
    assert jnp.allclose(y32, y_ref, atol=1e-3, rtol=1e-3), err32

    # 2) Performance path (default): bf16 MXU operands + approx EUP reciprocals.
    ybf = layer(x)
    jax.block_until_ready(ybf)
    errbf = float(jnp.max(jnp.abs(ybf - y_ref)))
    assert jnp.allclose(ybf, y_ref, atol=5e-2, rtol=5e-2), errbf

    print("KERNEL_OK")
</pallas_src>

<mosaic_0001>
module attributes {stable_mosaic.version = 11 : i64} {
  func.func @_layernorm_kernel(%arg0: i32, %arg1: memref<512x32xf32, #tpu.memory_space<vmem>>, %arg2: memref<1x32xf32, #tpu.memory_space<vmem>>, %arg3: memref<1x32xf32, #tpu.memory_space<vmem>>, %arg4: memref<512x32xf32, #tpu.memory_space<vmem>>) attributes {dimension_semantics = [#tpu.dimension_semantics<parallel>], iteration_bounds = array<i64: 1>, scalar_prefetch = 0 : i64, scratch_operands = 0 : i64, tpu.core_type = #tpu.core_type<tc>, window_params = [{transform_indices = @transform_0, window_bounds = array<i64: 512, 32>}, {pipeline_mode = #tpu.pipeline_mode<synchronous>, transform_indices = @transform_1, window_bounds = array<i64: 1, 32>}, {pipeline_mode = #tpu.pipeline_mode<synchronous>, transform_indices = @transform_2, window_bounds = array<i64: 1, 32>}, {transform_indices = @transform_3, window_bounds = array<i64: 512, 32>}]} {
    %c0 = arith.constant 0 : index
    %c0_0 = arith.constant 0 : index
    %0 = vector.load %arg1[%c0, %c0_0] : memref<512x32xf32, #tpu.memory_space<vmem>>, vector<512x32xf32>
    %cst = arith.constant dense<0.000000e+00> : vector<512xf32>
    %1 = vector.multi_reduction <add>, %0, %cst [1] : vector<512x32xf32> to vector<512xf32>
    %2 = vector.shape_cast %1 : vector<512xf32> to vector<512x1xf32>
    %cst_1 = arith.constant 3.200000e+01 : f32
    %3 = vector.broadcast %cst_1 : f32 to vector<512x1xf32>
    %4 = arith.divf %2, %3 : vector<512x1xf32>
    %5 = vector.broadcast %4 : vector<512x1xf32> to vector<512x32xf32>
    %6 = arith.subf %0, %5 : vector<512x32xf32>
    %7 = arith.mulf %6, %6 : vector<512x32xf32>
    %cst_2 = arith.constant dense<0.000000e+00> : vector<512xf32>
    %8 = vector.multi_reduction <add>, %7, %cst_2 [1] : vector<512x32xf32> to vector<512xf32>
    %9 = vector.shape_cast %8 : vector<512xf32> to vector<512x1xf32>
    %cst_3 = arith.constant 3.200000e+01 : f32
    %10 = vector.broadcast %cst_3 : f32 to vector<512x1xf32>
    %11 = arith.divf %9, %10 : vector<512x1xf32>
    %cst_4 = arith.constant 9.99999974E-6 : f32
    %12 = vector.broadcast %cst_4 : f32 to vector<512x1xf32>
    %13 = arith.addf %11, %12 : vector<512x1xf32>
    %14 = math.rsqrt %13 : vector<512x1xf32>
    %15 = vector.broadcast %14 : vector<512x1xf32> to vector<512x32xf32>
    %16 = arith.mulf %6, %15 : vector<512x32xf32>
    %c0_5 = arith.constant 0 : index
    %c0_6 = arith.constant 0 : index
    %17 = vector.load %arg2[%c0_5, %c0_6] : memref<1x32xf32, #tpu.memory_space<vmem>>, vector<1x32xf32>
    %18 = vector.broadcast %17 : vector<1x32xf32> to vector<512x32xf32>
    %19 = arith.mulf %16, %18 : vector<512x32xf32>
    %c0_7 = arith.constant 0 : index
    %c0_8 = arith.constant 0 : index
    %20 = vector.load %arg3[%c0_7, %c0_8] : memref<1x32xf32, #tpu.memory_space<vmem>>, vector<1x32xf32>
    %21 = vector.broadcast %20 : vector<1x32xf32> to vector<512x32xf32>
    %22 = arith.addf %19, %21 : vector<512x32xf32>
    %c0_9 = arith.constant 0 : index
    %c0_10 = arith.constant 0 : index
    %23 = vector.load %arg4[%c0_9, %c0_10] : memref<512x32xf32, #tpu.memory_space<vmem>>, vector<512x32xf32>
    tpu.vector_store %arg4[%c0_9, %c0_10], %22 {strides = array<i32>} : memref<512x32xf32, #tpu.memory_space<vmem>>, vector<512x32xf32>,
    return
  }
  func.func @transform_0(%arg0: i32) -> (i32, i32) {
    %c0_i32 = arith.constant 0 : i32
    %c0_i32_0 = arith.constant 0 : i32
    return %arg0, %c0_i32 : i32, i32
  }
  func.func @transform_1(%arg0: i32) -> (i32, i32) {
    %c0_i32 = arith.constant 0 : i32
    %c0_i32_0 = arith.constant 0 : i32
    %c0_i32_1 = arith.constant 0 : i32
    return %c0_i32, %c0_i32_0 : i32, i32
  }
  func.func @transform_2(%arg0: i32) -> (i32, i32) {
    %c0_i32 = arith.constant 0 : i32
    %c0_i32_0 = arith.constant 0 : i32
    %c0_i32_1 = arith.constant 0 : i32
    return %c0_i32, %c0_i32_0 : i32, i32
  }
  func.func @transform_3(%arg0: i32) -> (i32, i32) {
    %c0_i32 = arith.constant 0 : i32
    %c0_i32_0 = arith.constant 0 : i32
    return %arg0, %c0_i32 : i32, i32
  }
}

</mosaic_0001>

<llo_original>
// kernel: tpu_custom_call.1
$region0: #{tpu_custom_call.1}
  #allocation0 [shape = 'u32[]', space=smem, size = 0x4, offset = 0x4, fixed_abs, tag = 'smem constant byte address 0x4 - core index']
  #allocation1 [shape = 'u32[144,128]{1,0:T(1,128)}', space=vmem, size = 0x12000, scoped, tag = 'internal scratch']
  %s0 = inlined_call_operand.vmem [shape: f32[512,32], index: 0, kind: input, shape index: {}]
  %s1 = inlined_call_operand.vmem [shape: f32[1,32], index: 1, kind: input, shape index: {}]
  %s2 = inlined_call_operand.vmem [shape: f32[1,32], index: 2, kind: input, shape index: {}]
  %s3 = inlined_call_operand.vmem [shape: f32[512,32], index: 3, kind: output, shape index: {}]
  %s4 = sld [smem:[#allocation0]]
  $region22: #{tpu_custom_call.1} parent=0
    _
  %s6 = ssub.s32 1, %s4
  %s7 = scalar_select 0, %s6, %s4
  // Predicated region
  $region2: #{tpu_custom_call.1} parent=0 // pred_check
    _
  $region3: #{tpu_custom_call.1} parent=0 // pred_check_branch
    %9 = sbr.rel (0) target = $region5
  $region4: #{tpu_custom_call.1} parent=0 // pred_region
    _
  $region5: #{tpu_custom_call.1} parent=0 // pred_fallthru
    _
  // Predicated region
  $region6: #{tpu_custom_call.1} parent=0 // pred_check
    _
  $region7: #{tpu_custom_call.1} parent=0 // pred_check_branch
    %11 = sbr.rel (0) target = $region9
  $region8: #{tpu_custom_call.1} parent=0 // pred_region
    _
  $region9: #{tpu_custom_call.1} parent=0 // pred_fallthru
    _
  // Predicated region
  $region10: #{tpu_custom_call.1} parent=0 // pred_check
    _
  $region11: #{tpu_custom_call.1} parent=0 // pred_check_branch
    %13 = sbr.rel (0) target = $region13
  $region12: #{tpu_custom_call.1} parent=0 // pred_region
    _
  $region13: #{tpu_custom_call.1} parent=0 // pred_fallthru
    _
  %v14 = vld [vmem:[%s0] sm:$0xff]
  %v15 = vld [vmem:[%s0 + $0x8] sm:$0xff]
  %v16 = vld [vmem:[%s0 + $0x10] sm:$0xff]
  %v17 = vld [vmem:[%s0 + $0x18] sm:$0xff]
  %v18 = vld [vmem:[%s0 + $0x20] sm:$0xff]
  %v19 = vld [vmem:[%s0 + $0x28] sm:$0xff]
  %v20 = vld [vmem:[%s0 + $0x30] sm:$0xff]
  %v21 = vld [vmem:[%s0 + $0x38] sm:$0xff]
  %v22 = vld [vmem:[%s0 + $0x40] sm:$0xff]
  %v23 = vld [vmem:[%s0 + $0x48] sm:$0xff]
  %v24 = vld [vmem:[%s0 + $0x50] sm:$0xff]
  %v25 = vld [vmem:[%s0 + $0x58] sm:$0xff]
  %v26 = vld [vmem:[%s0 + $0x60] sm:$0xff]
  %v27 = vld [vmem:[%s0 + $0x68] sm:$0xff]
  %v28 = vld [vmem:[%s0 + $0x70] sm:$0xff]
  %v29 = vld [vmem:[%s0 + $0x78] sm:$0xff]
  %v30 = vld [vmem:[%s0 + $0x80] sm:$0xff]
  %v31 = vld [vmem:[%s0 + $0x88] sm:$0xff]
  %v32 = vld [vmem:[%s0 + $0x90] sm:$0xff]
  %v33 = vld [vmem:[%s0 + $0x98] sm:$0xff]
  %v34 = vld [vmem:[%s0 + $0xa0] sm:$0xff]
  %v35 = vld [vmem:[%s0 + $0xa8] sm:$0xff]
  %v36 = vld [vmem:[%s0 + $0xb0] sm:$0xff]
  %v37 = vld [vmem:[%s0 + $0xb8] sm:$0xff]
  %v38 = vld [vmem:[%s0 + $0xc0] sm:$0xff]
  %v39 = vld [vmem:[%s0 + $0xc8] sm:$0xff]
  %v40 = vld [vmem:[%s0 + $0xd0] sm:$0xff]
  %v41 = vld [vmem:[%s0 + $0xd8] sm:$0xff]
  %v42 = vld [vmem:[%s0 + $0xe0] sm:$0xff]
  %v43 = vld [vmem:[%s0 + $0xe8] sm:$0xff]
  %v44 = vld [vmem:[%s0 + $0xf0] sm:$0xff]
  %v45 = vld [vmem:[%s0 + $0xf8] sm:$0xff]
  %v46 = vld [vmem:[%s0 + $0x100] sm:$0xff]
  %v47 = vld [vmem:[%s0 + $0x108] sm:$0xff]
  %v48 = vld [vmem:[%s0 + $0x110] sm:$0xff]
  %v49 = vld [vmem:[%s0 + $0x118] sm:$0xff]
  %v50 = vld [vmem:[%s0 + $0x120] sm:$0xff]
  %v51 = vld [vmem:[%s0 + $0x128] sm:$0xff]
  %v52 = vld [vmem:[%s0 + $0x130] sm:$0xff]
  %v53 = vld [vmem:[%s0 + $0x138] sm:$0xff]
  %v54 = vld [vmem:[%s0 + $0x140] sm:$0xff]
  %v55 = vld [vmem:[%s0 + $0x148] sm:$0xff]
  %v56 = vld [vmem:[%s0 + $0x150] sm:$0xff]
  %v57 = vld [vmem:[%s0 + $0x158] sm:$0xff]
  %v58 = vld [vmem:[%s0 + $0x160] sm:$0xff]
  %v59 = vld [vmem:[%s0 + $0x168] sm:$0xff]
  %v60 = vld [vmem:[%s0 + $0x170] sm:$0xff]
  %v61 = vld [vmem:[%s0 + $0x178] sm:$0xff]
  %v62 = vld [vmem:[%s0 + $0x180] sm:$0xff]
  %v63 = vld [vmem:[%s0 + $0x188] sm:$0xff]
  %v64 = vld [vmem:[%s0 + $0x190] sm:$0xff]
  %v65 = vld [vmem:[%s0 + $0x198] sm:$0xff]
  %v66 = vld [vmem:[%s0 + $0x1a0] sm:$0xff]
  %v67 = vld [vmem:[%s0 + $0x1a8] sm:$0xff]
  %v68 = vld [vmem:[%s0 + $0x1b0] sm:$0xff]
  %v69 = vld [vmem:[%s0 + $0x1b8] sm:$0xff]
  %v70 = vld [vmem:[%s0 + $0x1c0] sm:$0xff]
  %v71 = vld [vmem:[%s0 + $0x1c8] sm:$0xff]
  %v72 = vld [vmem:[%s0 + $0x1d0] sm:$0xff]
  %v73 = vld [vmem:[%s0 + $0x1d8] sm:$0xff]
  %v74 = vld [vmem:[%s0 + $0x1e0] sm:$0xff]
  %v75 = vld [vmem:[%s0 + $0x1e8] sm:$0xff]
  %v76 = vld [vmem:[%s0 + $0x1f0] sm:$0xff]
  %v77 = vld [vmem:[%s0 + $0x1f8] sm:$0xff]
  %vm78 = vcmask 261120
  %v79 = vsel %vm78, %v14, 0.0
  %80 = vadd.xlane.f32.xlu0 %v79
  %v81 = vpop.xlane.xlu0 %80
  %v82 = vsel %vm78, %v15, 0.0
  %83 = vadd.xlane.f32.xlu0 %v82
  %v84 = vpop.xlane.xlu0 %83
  %v85 = vsel %vm78, %v16, 0.0
  %86 = vadd.xlane.f32.xlu0 %v85
  %v87 = vpop.xlane.xlu0 %86
  %v88 = vsel %vm78, %v17, 0.0
  %89 = vadd.xlane.f32.xlu0 %v88
  %v90 = vpop.xlane.xlu0 %89
  %v91 = vsel %vm78, %v18, 0.0
  %92 = vadd.xlane.f32.xlu0 %v91
  %v93 = vpop.xlane.xlu0 %92
  %v94 = vsel %vm78, %v19, 0.0
  %95 = vadd.xlane.f32.xlu0 %v94
  %v96 = vpop.xlane.xlu0 %95
  %v97 = vsel %vm78, %v20, 0.0
  %98 = vadd.xlane.f32.xlu0 %v97
  %v99 = vpop.xlane.xlu0 %98
  %v100 = vsel %vm78, %v21, 0.0
  %101 = vadd.xlane.f32.xlu0 %v100
  %v102 = vpop.xlane.xlu0 %101
  %v103 = vsel %vm78, %v22, 0.0
  %104 = vadd.xlane.f32.xlu0 %v103
  %v105 = vpop.xlane.xlu0 %104
  %v106 = vsel %vm78, %v23, 0.0
  %107 = vadd.xlane.f32.xlu0 %v106
  %v108 = vpop.xlane.xlu0 %107
  %v109 = vsel %vm78, %v24, 0.0
  %110 = vadd.xlane.f32.xlu0 %v109
  %v111 = vpop.xlane.xlu0 %110
  %v112 = vsel %vm78, %v25, 0.0
  %113 = vadd.xlane.f32.xlu0 %v112
  %v114 = vpop.xlane.xlu0 %113
  %v115 = vsel %vm78, %v26, 0.0
  %116 = vadd.xlane.f32.xlu0 %v115
  %v117 = vpop.xlane.xlu0 %116
  %v118 = vsel %vm78, %v27, 0.0
  %119 = vadd.xlane.f32.xlu0 %v118
  %v120 = vpop.xlane.xlu0 %119
  %v121 = vsel %vm78, %v28, 0.0
  %122 = vadd.xlane.f32.xlu0 %v121
  %v123 = vpop.xlane.xlu0 %122
  %v124 = vsel %vm78, %v29, 0.0
  %125 = vadd.xlane.f32.xlu0 %v124
  %v126 = vpop.xlane.xlu0 %125
  %v127 = vsel %vm78, %v30, 0.0
  %128 = vadd.xlane.f32.xlu0 %v127
  %v129 = vpop.xlane.xlu0 %128
  %v130 = vsel %vm78, %v31, 0.0
  %131 = vadd.xlane.f32.xlu0 %v130
  %v132 = vpop.xlane.xlu0 %131
  %v133 = vsel %vm78, %v32, 0.0
  %134 = vadd.xlane.f32.xlu0 %v133
  %v135 = vpop.xlane.xlu0 %134
  %v136 = vsel %vm78, %v33, 0.0
  %137 = vadd.xlane.f32.xlu0 %v136
  %v138 = vpop.xlane.xlu0 %137
  %v139 = vsel %vm78, %v34, 0.0
  %140 = vadd.xlane.f32.xlu0 %v139
  %v141 = vpop.xlane.xlu0 %140
  %v142 = vsel %vm78, %v35, 0.0
  %143 = vadd.xlane.f32.xlu0 %v142
  %v144 = vpop.xlane.xlu0 %143
  %v145 = vsel %vm78, %v36, 0.0
  %146 = vadd.xlane.f32.xlu0 %v145
  %v147 = vpop.xlane.xlu0 %146
  %v148 = vsel %vm78, %v37, 0.0
  %149 = vadd.xlane.f32.xlu0 %v148
  %v150 = vpop.xlane.xlu0 %149
  %v151 = vsel %vm78, %v38, 0.0
  %152 = vadd.xlane.f32.xlu0 %v151
  %v153 = vpop.xlane.xlu0 %152
  %v154 = vsel %vm78, %v39, 0.0
  %155 = vadd.xlane.f32.xlu0 %v154
  %v156 = vpop.xlane.xlu0 %155
  %v157 = vsel %vm78, %v40, 0.0
  %158 = vadd.xlane.f32.xlu0 %v157
  %v159 = vpop.xlane.xlu0 %158
  %v160 = vsel %vm78, %v41, 0.0
  %161 = vadd.xlane.f32.xlu0 %v160
  %v162 = vpop.xlane.xlu0 %161
  %v163 = vsel %vm78, %v42, 0.0
  %164 = vadd.xlane.f32.xlu0 %v163
  %v165 = vpop.xlane.xlu0 %164
  %v166 = vsel %vm78, %v43, 0.0
  %167 = vadd.xlane.f32.xlu0 %v166
  %v168 = vpop.xlane.xlu0 %167
  %v169 = vsel %vm78, %v44, 0.0
  %170 = vadd.xlane.f32.xlu0 %v169
  %v171 = vpop.xlane.xlu0 %170
  %v172 = vsel %vm78, %v45, 0.0
  %173 = vadd.xlane.f32.xlu0 %v172
  %v174 = vpop.xlane.xlu0 %173
  %v175 = vsel %vm78, %v46, 0.0
  %176 = vadd.xlane.f32.xlu0 %v175
  %v177 = vpop.xlane.xlu0 %176
  %v178 = vsel %vm78, %v47, 0.0
  %179 = vadd.xlane.f32.xlu0 %v178
  %v180 = vpop.xlane.xlu0 %179
  %v181 = vsel %vm78, %v48, 0.0
  %182 = vadd.xlane.f32.xlu0 %v181
  %v183 = vpop.xlane.xlu0 %182
  %v184 = vsel %vm78, %v49, 0.0
  %185 = vadd.xlane.f32.xlu0 %v184
  %v186 = vpop.xlane.xlu0 %185
  %v187 = vsel %vm78, %v50, 0.0
  %188 = vadd.xlane.f32.xlu0 %v187
  %v189 = vpop.xlane.xlu0 %188
  %v190 = vsel %vm78, %v51, 0.0
  %191 = vadd.xlane.f32.xlu0 %v190
  %v192 = vpop.xlane.xlu0 %191
  %v193 = vsel %vm78, %v52, 0.0
  %194 = vadd.xlane.f32.xlu0 %v193
  %v195 = vpop.xlane.xlu0 %194
  %v196 = vsel %vm78, %v53, 0.0
  %197 = vadd.xlane.f32.xlu0 %v196
  %v198 = vpop.xlane.xlu0 %197
  %v199 = vsel %vm78, %v54, 0.0
  %200 = vadd.xlane.f32.xlu0 %v199
  %v201 = vpop.xlane.xlu0 %200
  %v202 = vsel %vm78, %v55, 0.0
  %203 = vadd.xlane.f32.xlu0 %v202
  %v204 = vpop.xlane.xlu0 %203
  %v205 = vsel %vm78, %v56, 0.0
  %206 = vadd.xlane.f32.xlu0 %v205
  %v207 = vpop.xlane.xlu0 %206
  %v208 = vsel %vm78, %v57, 0.0
  %209 = vadd.xlane.f32.xlu0 %v208
  %v210 = vpop.xlane.xlu0 %209
  %v211 = vsel %vm78, %v58, 0.0
  %212 = vadd.xlane.f32.xlu0 %v211
  %v213 = vpop.xlane.xlu0 %212
  %v214 = vsel %vm78, %v59, 0.0
  %215 = vadd.xlane.f32.xlu0 %v214
  %v216 = vpop.xlane.xlu0 %215
  %v217 = vsel %vm78, %v60, 0.0
  %218 = vadd.xlane.f32.xlu0 %v217
  %v219 = vpop.xlane.xlu0 %218
  %v220 = vsel %vm78, %v61, 0.0
  %221 = vadd.xlane.f32.xlu0 %v220
  %v222 = vpop.xlane.xlu0 %221
  %v223 = vsel %vm78, %v62, 0.0
  %224 = vadd.xlane.f32.xlu0 %v223
  %v225 = vpop.xlane.xlu0 %224
  %v226 = vsel %vm78, %v63, 0.0
  %227 = vadd.xlane.f32.xlu0 %v226
  %v228 = vpop.xlane.xlu0 %227
  %v229 = vsel %vm78, %v64, 0.0
  %230 = vadd.xlane.f32.xlu0 %v229
  %v231 = vpop.xlane.xlu0 %230
  %v232 = vsel %vm78, %v65, 0.0
  %233 = vadd.xlane.f32.xlu0 %v232
  %v234 = vpop.xlane.xlu0 %233
  %v235 = vsel %vm78, %v66, 0.0
  %236 = vadd.xlane.f32.xlu0 %v235
  %v237 = vpop.xlane.xlu0 %236
  %v238 = vsel %vm78, %v67, 0.0
  %239 = vadd.xlane.f32.xlu0 %v238
  %v240 = vpop.xlane.xlu0 %239
  %v241 = vsel %vm78, %v68, 0.0
  %242 = vadd.xlane.f32.xlu0 %v241
  %v243 = vpop.xlane.xlu0 %242
  %v244 = vsel %vm78, %v69, 0.0
  %245 = vadd.xlane.f32.xlu0 %v244
  %v246 = vpop.xlane.xlu0 %245
  %v247 = vsel %vm78, %v70, 0.0
  %248 = vadd.xlane.f32.xlu0 %v247
  %v249 = vpop.xlane.xlu0 %248
  %v250 = vsel %vm78, %v71, 0.0
  %251 = vadd.xlane.f32.xlu0 %v250
  %v252 = vpop.xlane.xlu0 %251
  %v253 = vsel %vm78, %v72, 0.0
  %254 = vadd.xlane.f32.xlu0 %v253
  %v255 = vpop.xlane.xlu0 %254
  %v256 = vsel %vm78, %v73, 0.0
  %257 = vadd.xlane.f32.xlu0 %v256
  %v258 = vpop.xlane.xlu0 %257
  %v259 = vsel %vm78, %v74, 0.0
  %260 = vadd.xlane.f32.xlu0 %v259
  %v261 = vpop.xlane.xlu0 %260
  %v262 = vsel %vm78, %v75, 0.0
  %263 = vadd.xlane.f32.xlu0 %v262
  %v264 = vpop.xlane.xlu0 %263
  %v265 = vsel %vm78, %v76, 0.0
  %266 = vadd.xlane.f32.xlu0 %v265
  %v267 = vpop.xlane.xlu0 %266
  %v268 = vsel %vm78, %v77, 0.0
  %269 = vadd.xlane.f32.xlu0 %v268
  %v270 = vpop.xlane.xlu0 %269
  %v271 = vrcp.pop 32.0
  %v272 = vmul.f32 %v81, %v271
  %v273 = vmul.f32 %v84, %v271
  %v274 = vmul.f32 %v87, %v271
  %v275 = vmul.f32 %v90, %v271
  %v276 = vmul.f32 %v93, %v271
  %v277 = vmul.f32 %v96, %v271
  %v278 = vmul.f32 %v99, %v271
  %v279 = vmul.f32 %v102, %v271
  %v280 = vmul.f32 %v105, %v271
  %v281 = vmul.f32 %v108, %v271
  %v282 = vmul.f32 %v111, %v271
  %v283 = vmul.f32 %v114, %v271
  %v284 = vmul.f32 %v117, %v271
  %v285 = vmul.f32 %v120, %v271
  %v286 = vmul.f32 %v123, %v271
  %v287 = vmul.f32 %v126, %v271
  %v288 = vmul.f32 %v129, %v271
  %v289 = vmul.f32 %v132, %v271
  %v290 = vmul.f32 %v135, %v271
  %v291 = vmul.f32 %v138, %v271
  %v292 = vmul.f32 %v141, %v271
  %v293 = vmul.f32 %v144, %v271
  %v294 = vmul.f32 %v147, %v271
  %v295 = vmul.f32 %v150, %v271
  %v296 = vmul.f32 %v153, %v271
  %v297 = vmul.f32 %v156, %v271
  %v298 = vmul.f32 %v159, %v271
  %v299 = vmul.f32 %v162, %v271
  %v300 = vmul.f32 %v165, %v271
  %v301 = vmul.f32 %v168, %v271
  %v302 = vmul.f32 %v171, %v271
  %v303 = vmul.f32 %v174, %v271
  %v304 = vmul.f32 %v177, %v271
  %v305 = vmul.f32 %v180, %v271
  %v306 = vmul.f32 %v183, %v271
  %v307 = vmul.f32 %v186, %v271
  %v308 = vmul.f32 %v189, %v271
  %v309 = vmul.f32 %v192, %v271
  %v310 = vmul.f32 %v195, %v271
  %v311 = vmul.f32 %v198, %v271
  %v312 = vmul.f32 %v201, %v271
  %v313 = vmul.f32 %v204, %v271
  %v314 = vmul.f32 %v207, %v271
  %v315 = vmul.f32 %v210, %v271
  %v316 = vmul.f32 %v213, %v271
  %v317 = vmul.f32 %v216, %v271
  %v318 = vmul.f32 %v219, %v271
  %v319 = vmul.f32 %v222, %v271
  %v320 = vmul.f32 %v225, %v271
  %v321 = vmul.f32 %v228, %v271
  %v322 = vmul.f32 %v231, %v271
  %v323 = vmul.f32 %v234, %v271
  %v324 = vmul.f32 %v237, %v271
  %v325 = vmul.f32 %v240, %v271
  %v326 = vmul.f32 %v243, %v271
  %v327 = vmul.f32 %v246, %v271
  %v328 = vmul.f32 %v249, %v271
  %v329 = vmul.f32 %v252, %v271
  %v330 = vmul.f32 %v255, %v271
  %v331 = vmul.f32 %v258, %v271
  %v332 = vmul.f32 %v261, %v271
  %v333 = vmul.f32 %v264, %v271
  %v334 = vmul.f32 %v267, %v271
  %v335 = vmul.f32 %v270, %v271
  %v336 = vsub.f32 %v14, %v272
  %v337 = vsub.f32 %v15, %v273
  %v338 = vsub.f32 %v16, %v274
  %v339 = vsub.f32 %v17, %v275
  %v340 = vsub.f32 %v18, %v276
  %v341 = vsub.f32 %v19, %v277
  %v342 = vsub.f32 %v20, %v278
  %v343 = vsub.f32 %v21, %v279
  %v344 = vsub.f32 %v22, %v280
  %v345 = vsub.f32 %v23, %v281
  %v346 = vsub.f32 %v24, %v282
  %v347 = vsub.f32 %v25, %v283
  %v348 = vsub.f32 %v26, %v284
  %v349 = vsub.f32 %v27, %v285
  %v350 = vsub.f32 %v28, %v286
  %v351 = vsub.f32 %v29, %v287
  %v352 = vsub.f32 %v30, %v288
  %v353 = vsub.f32 %v31, %v289
  %v354 = vsub.f32 %v32, %v290
  %v355 = vsub.f32 %v33, %v291
  %v356 = vsub.f32 %v34, %v292
  %v357 = vsub.f32 %v35, %v293
  %v358 = vsub.f32 %v36, %v294
  %v359 = vsub.f32 %v37, %v295
  %v360 = vsub.f32 %v38, %v296
  %v361 = vsub.f32 %v39, %v297
  %v362 = vsub.f32 %v40, %v298
  %v363 = vsub.f32 %v41, %v299
  %v364 = vsub.f32 %v42, %v300
  %v365 = vsub.f32 %v43, %v301
  %v366 = vsub.f32 %v44, %v302
  %v367 = vsub.f32 %v45, %v303
  %v368 = vsub.f32 %v46, %v304
  %v369 = vsub.f32 %v47, %v305
  %v370 = vsub.f32 %v48, %v306
  %v371 = vsub.f32 %v49, %v307
  %v372 = vsub.f32 %v50, %v308
  %v373 = vsub.f32 %v51, %v309
  %v374 = vsub.f32 %v52, %v310
  %v375 = vsub.f32 %v53, %v311
  %v376 = vsub.f32 %v54, %v312
  %v377 = vsub.f32 %v55, %v313
  %v378 = vsub.f32 %v56, %v314
  %v379 = vsub.f32 %v57, %v315
  %v380 = vsub.f32 %v58, %v316
  %v381 = vsub.f32 %v59, %v317
  %v382 = vsub.f32 %v60, %v318
  %v383 = vsub.f32 %v61, %v319
  %v384 = vsub.f32 %v62, %v320
  %v385 = vsub.f32 %v63, %v321
  %v386 = vsub.f32 %v64, %v322
  %v387 = vsub.f32 %v65, %v323
  %v388 = vsub.f32 %v66, %v324
  %v389 = vsub.f32 %v67, %v325
  %v390 = vsub.f32 %v68, %v326
  %v391 = vsub.f32 %v69, %v327
  %v392 = vsub.f32 %v70, %v328
  %v393 = vsub.f32 %v71, %v329
  %v394 = vsub.f32 %v72, %v330
  %v395 = vsub.f32 %v73, %v331
  %v396 = vsub.f32 %v74, %v332
  %v397 = vsub.f32 %v75, %v333
  %v398 = vsub.f32 %v76, %v334
  %v399 = vsub.f32 %v77, %v335
  %v400 = vmul.f32 %v336, %v336
  %v401 = vmul.f32 %v337, %v337
  %v402 = vmul.f32 %v338, %v338
  %v403 = vmul.f32 %v339, %v339
  %v404 = vmul.f32 %v340, %v340
  %v405 = vmul.f32 %v341, %v341
  %v406 = vmul.f32 %v342, %v342
  %v407 = vmul.f32 %v343, %v343
  %v408 = vmul.f32 %v344, %v344
  %v409 = vmul.f32 %v345, %v345
  %v410 = vmul.f32 %v346, %v346
  %v411 = vmul.f32 %v347, %v347
  %v412 = vmul.f32 %v348, %v348
  %v413 = vmul.f32 %v349, %v349
  %v414 = vmul.f32 %v350, %v350
  %v415 = vmul.f32 %v351, %v351
  %v416 = vmul.f32 %v352, %v352
  %v417 = vmul.f32 %v353, %v353
  %v418 = vmul.f32 %v354, %v354
  %v419 = vmul.f32 %v355, %v355
  %v420 = vmul.f32 %v356, %v356
  %v421 = vmul.f32 %v357, %v357
  %v422 = vmul.f32 %v358, %v358
  %v423 = vmul.f32 %v359, %v359
  %v424 = vmul.f32 %v360, %v360
  %v425 = vmul.f32 %v361, %v361
  %v426 = vmul.f32 %v362, %v362
  %v427 = vmul.f32 %v363, %v363
  %v428 = vmul.f32 %v364, %v364
  %v429 = vmul.f32 %v365, %v365
  %v430 = vmul.f32 %v366, %v366
  %v431 = vmul.f32 %v367, %v367
  %v432 = vmul.f32 %v368, %v368
  %v433 = vmul.f32 %v369, %v369
  %v434 = vmul.f32 %v370, %v370
  %v435 = vmul.f32 %v371, %v371
  %v436 = vmul.f32 %v372, %v372
  %v437 = vmul.f32 %v373, %v373
  %v438 = vmul.f32 %v374, %v374
  %v439 = vmul.f32 %v375, %v375
  %v440 = vmul.f32 %v376, %v376
  %v441 = vmul.f32 %v377, %v377
  %v442 = vmul.f32 %v378, %v378
  %v443 = vmul.f32 %v379, %v379
  %v444 = vmul.f32 %v380, %v380
  %v445 = vmul.f32 %v381, %v381
  %v446 = vmul.f32 %v382, %v382
  %v447 = vmul.f32 %v383, %v383
  %v448 = vmul.f32 %v384, %v384
  %v449 = vmul.f32 %v385, %v385
  %v450 = vmul.f32 %v386, %v386
  %v451 = vmul.f32 %v387, %v387
  %v452 = vmul.f32 %v388, %v388
  %v453 = vmul.f32 %v389, %v389
  %v454 = vmul.f32 %v390, %v390
  %v455 = vmul.f32 %v391, %v391
  %v456 = vmul.f32 %v392, %v392
  %v457 = vmul.f32 %v393, %v393
  %v458 = vmul.f32 %v394, %v394
  %v459 = vmul.f32 %v395, %v395
  %v460 = vmul.f32 %v396, %v396
  %v461 = vmul.f32 %v397, %v397
  %v462 = vmul.f32 %v398, %v398
  %v463 = vmul.f32 %v399, %v399
  %v464 = vsel %vm78, %v400, 0.0
  %465 = vadd.xlane.f32.xlu0 %v464
  %v466 = vpop.xlane.xlu0 %465
  %v467 = vsel %vm78, %v401, 0.0
  %468 = vadd.xlane.f32.xlu0 %v467
  %v469 = vpop.xlane.xlu0 %468
  %v470 = vsel %vm78, %v402, 0.0
  %471 = vadd.xlane.f32.xlu0 %v470
  %v472 = vpop.xlane.xlu0 %471
  %v473 = vsel %vm78, %v403, 0.0
  %474 = vadd.xlane.f32.xlu0 %v473
  %v475 = vpop.xlane.xlu0 %474
  %v476 = vsel %vm78, %v404, 0.0
  %477 = vadd.xlane.f32.xlu0 %v476
  %v478 = vpop.xlane.xlu0 %477
  %v479 = vsel %vm78, %v405, 0.0
  %480 = vadd.xlane.f32.xlu0 %v479
  %v481 = vpop.xlane.xlu0 %480
  %v482 = vsel %vm78, %v406, 0.0
  %483 = vadd.xlane.f32.xlu0 %v482
  %v484 = vpop.xlane.xlu0 %483
  %v485 = vsel %vm78, %v407, 0.0
  %486 = vadd.xlane.f32.xlu0 %v485
  %v487 = vpop.xlane.xlu0 %486
  %v488 = vsel %vm78, %v408, 0.0
  %489 = vadd.xlane.f32.xlu0 %v488
  %v490 = vpop.xlane.xlu0 %489
  %v491 = vsel %vm78, %v409, 0.0
  %492 = vadd.xlane.f32.xlu0 %v491
  %v493 = vpop.xlane.xlu0 %492
  %v494 = vsel %vm78, %v410, 0.0
  %495 = vadd.xlane.f32.xlu0 %v494
  %v496 = vpop.xlane.xlu0 %495
  %v497 = vsel %vm78, %v411, 0.0
  %498 = vadd.xlane.f32.xlu0 %v497
  %v499 = vpop.xlane.xlu0 %498
  %v500 = vsel %vm78, %v412, 0.0
  %501 = vadd.xlane.f32.xlu0 %v500
  %v502 = vpop.xlane.xlu0 %501
  %v503 = vsel %vm78, %v413, 0.0
  %504 = vadd.xlane.f32.xlu0 %v503
  %v505 = vpop.xlane.xlu0 %504
  %v506 = vsel %vm78, %v414, 0.0
  %507 = vadd.xlane.f32.xlu0 %v506
  %v508 = vpop.xlane.xlu0 %507
  %v509 = vsel %vm78, %v415, 0.0
  %510 = vadd.xlane.f32.xlu0 %v509
  %v511 = vpop.xlane.xlu0 %510
  %v512 = vsel %vm78, %v416, 0.0
  %513 = vadd.xlane.f32.xlu0 %v512
  %v514 = vpop.xlane.xlu0 %513
  %v515 = vsel %vm78, %v417, 0.0
  %516 = vadd.xlane.f32.xlu0 %v515
  %v517 = vpop.xlane.xlu0 %516
  %v518 = vsel %vm78, %v418, 0.0
  %519 = vadd.xlane.f32.xlu0 %v518
  %v520 = vpop.xlane.xlu0 %519
  %v521 = vsel %vm78, %v419, 0.0
  %522 = vadd.xlane.f32.xlu0 %v521
  %v523 = vpop.xlane.xlu0 %522
  %v524 = vsel %vm78, %v420, 0.0
  %525 = vadd.xlane.f32.xlu0 %v524
  %v526 = vpop.xlane.xlu0 %525
  %v527 = vsel %vm78, %v421, 0.0
  %528 = vadd.xlane.f32.xlu0 %v527
  %v529 = vpop.xlane.xlu0 %528
  %v530 = vsel %vm78, %v422, 0.0
  %531 = vadd.xlane.f32.xlu0 %v530
  %v532 = vpop.xlane.xlu0 %531
  %v533 = vsel %vm78, %v423, 0.0
  %534 = vadd.xlane.f32.xlu0 %v533
  %v535 = vpop.xlane.xlu0 %534
  %v536 = vsel %vm78, %v424, 0.0
  %537 = vadd.xlane.f32.xlu0 %v536
  %v538 = vpop.xlane.xlu0 %537
  %v539 = vsel %vm78, %v425, 0.0
  %540 = vadd.xlane.f32.xlu0 %v539
  %v541 = vpop.xlane.xlu0 %540
  %v542 = vsel %vm78, %v426, 0.0
  %543 = vadd.xlane.f32.xlu0 %v542
  %v544 = vpop.xlane.xlu0 %543
  %v545 = vsel %vm78, %v427, 0.0
  %546 = vadd.xlane.f32.xlu0 %v545
  %v547 = vpop.xlane.xlu0 %546
  %v548 = vsel %vm78, %v428, 0.0
  %549 = vadd.xlane.f32.xlu0 %v548
  %v550 = vpop.xlane.xlu0 %549
  %v551 = vsel %vm78, %v429, 0.0
  %552 = vadd.xlane.f32.xlu0 %v551
  %v553 = vpop.xlane.xlu0 %552
  %v554 = vsel %vm78, %v430, 0.0
  %555 = vadd.xlane.f32.xlu0 %v554
  %v556 = vpop.xlane.xlu0 %555
  %v557 = vsel %vm78, %v431, 0.0
  %558 = vadd.xlane.f32.xlu0 %v557
  %v559 = vpop.xlane.xlu0 %558
  %v560 = vsel %vm78, %v432, 0.0
  %561 = vadd.xlane.f32.xlu0 %v560
  %v562 = vpop.xlane.xlu0 %561
  %v563 = vsel %vm78, %v433, 0.0
  %564 = vadd.xlane.f32.xlu0 %v563
  %v565 = vpop.xlane.xlu0 %564
  %v566 = vsel %vm78, %v434, 0.0
  %567 = vadd.xlane.f32.xlu0 %v566
  %v568 = vpop.xlane.xlu0 %567
  %v569 = vsel %vm78, %v435, 0.0
  %570 = vadd.xlane.f32.xlu0 %v569
  %v571 = vpop.xlane.xlu0 %570
  %v572 = vsel %vm78, %v436, 0.0
  %573 = vadd.xlane.f32.xlu0 %v572
  %v574 = vpop.xlane.xlu0 %573
  %v575 = vsel %vm78, %v437, 0.0
  %576 = vadd.xlane.f32.xlu0 %v575
  %v577 = vpop.xlane.xlu0 %576
  %v578 = vsel %vm78, %v438, 0.0
  %579 = vadd.xlane.f32.xlu0 %v578
  %v580 = vpop.xlane.xlu0 %579
  %v581 = vsel %vm78, %v439, 0.0
  %582 = vadd.xlane.f32.xlu0 %v581
  %v583 = vpop.xlane.xlu0 %582
  %v584 = vsel %vm78, %v440, 0.0
  %585 = vadd.xlane.f32.xlu0 %v584
  %v586 = vpop.xlane.xlu0 %585
  %v587 = vsel %vm78, %v441, 0.0
  %588 = vadd.xlane.f32.xlu0 %v587
  %v589 = vpop.xlane.xlu0 %588
  %v590 = vsel %vm78, %v442, 0.0
  %591 = vadd.xlane.f32.xlu0 %v590
  %v592 = vpop.xlane.xlu0 %591
  %v593 = vsel %vm78, %v443, 0.0
  %594 = vadd.xlane.f32.xlu0 %v593
  %v595 = vpop.xlane.xlu0 %594
  %v596 = vsel %vm78, %v444, 0.0
  %597 = vadd.xlane.f32.xlu0 %v596
  %v598 = vpop.xlane.xlu0 %597
  %v599 = vsel %vm78, %v445, 0.0
  %600 = vadd.xlane.f32.xlu0 %v599
  %v601 = vpop.xlane.xlu0 %600
  %v602 = vsel %vm78, %v446, 0.0
  %603 = vadd.xlane.f32.xlu0 %v602
  %v604 = vpop.xlane.xlu0 %603
  %v605 = vsel %vm78, %v447, 0.0
  %606 = vadd.xlane.f32.xlu0 %v605
  %v607 = vpop.xlane.xlu0 %606
  %v608 = vsel %vm78, %v448, 0.0
  %609 = vadd.xlane.f32.xlu0 %v608
  %v610 = vpop.xlane.xlu0 %609
  %v611 = vsel %vm78, %v449, 0.0
  %612 = vadd.xlane.f32.xlu0 %v611
  %v613 = vpop.xlane.xlu0 %612
  %v614 = vsel %vm78, %v450, 0.0
  %615 = vadd.xlane.f32.xlu0 %v614
  %v616 = vpop.xlane.xlu0 %615
  %v617 = vsel %vm78, %v451, 0.0
  %618 = vadd.xlane.f32.xlu0 %v617
  %v619 = vpop.xlane.xlu0 %618
  %v620 = vsel %vm78, %v452, 0.0
  %621 = vadd.xlane.f32.xlu0 %v620
  %v622 = vpop.xlane.xlu0 %621
  %v623 = vsel %vm78, %v453, 0.0
  %624 = vadd.xlane.f32.xlu0 %v623
  %v625 = vpop.xlane.xlu0 %624
  %v626 = vsel %vm78, %v454, 0.0
  %627 = vadd.xlane.f32.xlu0 %v626
  %v628 = vpop.xlane.xlu0 %627
  %v629 = vsel %vm78, %v455, 0.0
  %630 = vadd.xlane.f32.xlu0 %v629
  %v631 = vpop.xlane.xlu0 %630
  %v632 = vsel %vm78, %v456, 0.0
  %633 = vadd.xlane.f32.xlu0 %v632
  %v634 = vpop.xlane.xlu0 %633
  %v635 = vsel %vm78, %v457, 0.0
  %636 = vadd.xlane.f32.xlu0 %v635
  %v637 = vpop.xlane.xlu0 %636
  %v638 = vsel %vm78, %v458, 0.0
  %639 = vadd.xlane.f32.xlu0 %v638
  %v640 = vpop.xlane.xlu0 %639
  %v641 = vsel %vm78, %v459, 0.0
  %642 = vadd.xlane.f32.xlu0 %v641
  %v643 = vpop.xlane.xlu0 %642
  %v644 = vsel %vm78, %v460, 0.0
  %645 = vadd.xlane.f32.xlu0 %v644
  %v646 = vpop.xlane.xlu0 %645
  %v647 = vsel %vm78, %v461, 0.0
  %648 = vadd.xlane.f32.xlu0 %v647
  %v649 = vpop.xlane.xlu0 %648
  %v650 = vsel %vm78, %v462, 0.0
  %651 = vadd.xlane.f32.xlu0 %v650
  %v652 = vpop.xlane.xlu0 %651
  %v653 = vsel %vm78, %v463, 0.0
  %654 = vadd.xlane.f32.xlu0 %v653
  %v655 = vpop.xlane.xlu0 %654
  %v656 = vmul.f32 %v466, %v271
  %v657 = vmul.f32 %v469, %v271
  %v658 = vmul.f32 %v472, %v271
  %v659 = vmul.f32 %v475, %v271
  %v660 = vmul.f32 %v478, %v271
  %v661 = vmul.f32 %v481, %v271
  %v662 = vmul.f32 %v484, %v271
  %v663 = vmul.f32 %v487, %v271
  %v664 = vmul.f32 %v490, %v271
  %v665 = vmul.f32 %v493, %v271
  %v666 = vmul.f32 %v496, %v271
  %v667 = vmul.f32 %v499, %v271
  %v668 = vmul.f32 %v502, %v271
  %v669 = vmul.f32 %v505, %v271
  %v670 = vmul.f32 %v508, %v271
  %v671 = vmul.f32 %v511, %v271
  %v672 = vmul.f32 %v514, %v271
  %v673 = vmul.f32 %v517, %v271
  %v674 = vmul.f32 %v520, %v271
  %v675 = vmul.f32 %v523, %v271
  %v676 = vmul.f32 %v526, %v271
  %v677 = vmul.f32 %v529, %v271
  %v678 = vmul.f32 %v532, %v271
  %v679 = vmul.f32 %v535, %v271
  %v680 = vmul.f32 %v538, %v271
  %v681 = vmul.f32 %v541, %v271
  %v682 = vmul.f32 %v544, %v271
  %v683 = vmul.f32 %v547, %v271
  %v684 = vmul.f32 %v550, %v271
  %v685 = vmul.f32 %v553, %v271
  %v686 = vmul.f32 %v556, %v271
  %v687 = vmul.f32 %v559, %v271
  %v688 = vmul.f32 %v562, %v271
  %v689 = vmul.f32 %v565, %v271
  %v690 = vmul.f32 %v568, %v271
  %v691 = vmul.f32 %v571, %v271
  %v692 = vmul.f32 %v574, %v271
  %v693 = vmul.f32 %v577, %v271
  %v694 = vmul.f32 %v580, %v271
  %v695 = vmul.f32 %v583, %v271
  %v696 = vmul.f32 %v586, %v271
  %v697 = vmul.f32 %v589, %v271
  %v698 = vmul.f32 %v592, %v271
  %v699 = vmul.f32 %v595, %v271
  %v700 = vmul.f32 %v598, %v271
  %v701 = vmul.f32 %v601, %v271
  %v702 = vmul.f32 %v604, %v271
  %v703 = vmul.f32 %v607, %v271
  %v704 = vmul.f32 %v610, %v271
  %v705 = vmul.f32 %v613, %v271
  %v706 = vmul.f32 %v616, %v271
  %v707 = vmul.f32 %v619, %v271
  %v708 = vmul.f32 %v622, %v271
  %v709 = vmul.f32 %v625, %v271
  %v710 = vmul.f32 %v628, %v271
  %v711 = vmul.f32 %v631, %v271
  %v712 = vmul.f32 %v634, %v271
  %v713 = vmul.f32 %v637, %v271
  %v714 = vmul.f32 %v640, %v271
  %v715 = vmul.f32 %v643, %v271
  %v716 = vmul.f32 %v646, %v271
  %v717 = vmul.f32 %v649, %v271
  %v718 = vmul.f32 %v652, %v271
  %v719 = vmul.f32 %v655, %v271
  %v720 = vadd.f32 %v656, 1e-05
  %v721 = vadd.f32 %v657, 1e-05
  %v722 = vadd.f32 %v658, 1e-05
  %v723 = vadd.f32 %v659, 1e-05
  %v724 = vadd.f32 %v660, 1e-05
  %v725 = vadd.f32 %v661, 1e-05
  %v726 = vadd.f32 %v662, 1e-05
  %v727 = vadd.f32 %v663, 1e-05
  %v728 = vadd.f32 %v664, 1e-05
  %v729 = vadd.f32 %v665, 1e-05
  %v730 = vadd.f32 %v666, 1e-05
  %v731 = vadd.f32 %v667, 1e-05
  %v732 = vadd.f32 %v668, 1e-05
  %v733 = vadd.f32 %v669, 1e-05
  %v734 = vadd.f32 %v670, 1e-05
  %v735 = vadd.f32 %v671, 1e-05
  %v736 = vadd.f32 %v672, 1e-05
  %v737 = vadd.f32 %v673, 1e-05
  %v738 = vadd.f32 %v674, 1e-05
  %v739 = vadd.f32 %v675, 1e-05
  %v740 = vadd.f32 %v676, 1e-05
  %v741 = vadd.f32 %v677, 1e-05
  %v742 = vadd.f32 %v678, 1e-05
  %v743 = vadd.f32 %v679, 1e-05
  %v744 = vadd.f32 %v680, 1e-05
  %v745 = vadd.f32 %v681, 1e-05
  %v746 = vadd.f32 %v682, 1e-05
  %v747 = vadd.f32 %v683, 1e-05
  %v748 = vadd.f32 %v684, 1e-05
  %v749 = vadd.f32 %v685, 1e-05
  %v750 = vadd.f32 %v686, 1e-05
  %v751 = vadd.f32 %v687, 1e-05
  %v752 = vadd.f32 %v688, 1e-05
  %v753 = vadd.f32 %v689, 1e-05
  %v754 = vadd.f32 %v690, 1e-05
  %v755 = vadd.f32 %v691, 1e-05
  %v756 = vadd.f32 %v692, 1e-05
  %v757 = vadd.f32 %v693, 1e-05
  %v758 = vadd.f32 %v694, 1e-05
  %v759 = vadd.f32 %v695, 1e-05
  %v760 = vadd.f32 %v696, 1e-05
  %v761 = vadd.f32 %v697, 1e-05
  %v762 = vadd.f32 %v698, 1e-05
  %v763 = vadd.f32 %v699, 1e-05
  %v764 = vadd.f32 %v700, 1e-05
  %v765 = vadd.f32 %v701, 1e-05
  %v766 = vadd.f32 %v702, 1e-05
  %v767 = vadd.f32 %v703, 1e-05
  %v768 = vadd.f32 %v704, 1e-05
  %v769 = vadd.f32 %v705, 1e-05
  %v770 = vadd.f32 %v706, 1e-05
  %v771 = vadd.f32 %v707, 1e-05
  %v772 = vadd.f32 %v708, 1e-05
  %v773 = vadd.f32 %v709, 1e-05
  %v774 = vadd.f32 %v710, 1e-05
  %v775 = vadd.f32 %v711, 1e-05
  %v776 = vadd.f32 %v712, 1e-05
  %v777 = vadd.f32 %v713, 1e-05
  %v778 = vadd.f32 %v714, 1e-05
  %v779 = vadd.f32 %v715, 1e-05
  %v780 = vadd.f32 %v716, 1e-05
  %v781 = vadd.f32 %v717, 1e-05
  %v782 = vadd.f32 %v718, 1e-05
  %v783 = vadd.f32 %v719, 1e-05
  %v784 = vrsqrt.pop %v720
  %v785 = vrsqrt.pop %v721
  %v786 = vrsqrt.pop %v722
  %v787 = vrsqrt.pop %v723
  %v788 = vrsqrt.pop %v724
  %v789 = vrsqrt.pop %v725
  %v790 = vrsqrt.pop %v726
  %v791 = vrsqrt.pop %v727
  %v792 = vrsqrt.pop %v728
  %v793 = vrsqrt.pop %v729
  %v794 = vrsqrt.pop %v730
  %v795 = vrsqrt.pop %v731
  %v796 = vrsqrt.pop %v732
  %v797 = vrsqrt.pop %v733
  %v798 = vrsqrt.pop %v734
  %v799 = vrsqrt.pop %v735
  %v800 = vrsqrt.pop %v736
  %v801 = vrsqrt.pop %v737
  %v802 = vrsqrt.pop %v738
  %v803 = vrsqrt.pop %v739
  %v804 = vrsqrt.pop %v740
  %v805 = vrsqrt.pop %v741
  %v806 = vrsqrt.pop %v742
  %v807 = vrsqrt.pop %v743
  %v808 = vrsqrt.pop %v744
  %v809 = vrsqrt.pop %v745
  %v810 = vrsqrt.pop %v746
  %v811 = vrsqrt.pop %v747
  %v812 = vrsqrt.pop %v748
  %v813 = vrsqrt.pop %v749
  %v814 = vrsqrt.pop %v750
  %v815 = vrsqrt.pop %v751
  %v816 = vrsqrt.pop %v752
  %v817 = vrsqrt.pop %v753
  %v818 = vrsqrt.pop %v754
  %v819 = vrsqrt.pop %v755
  %v820 = vrsqrt.pop %v756
  %v821 = vrsqrt.pop %v757
  %v822 = vrsqrt.pop %v758
  %v823 = vrsqrt.pop %v759
  %v824 = vrsqrt.pop %v760
  %v825 = vrsqrt.pop %v761
  %v826 = vrsqrt.pop %v762
  %v827 = vrsqrt.pop %v763
  %v828 = vrsqrt.pop %v764
  %v829 = vrsqrt.pop %v765
  %v830 = vrsqrt.pop %v766
  %v831 = vrsqrt.pop %v767
  %v832 = vrsqrt.pop %v768
  %v833 = vrsqrt.pop %v769
  %v834 = vrsqrt.pop %v770
  %v835 = vrsqrt.pop %v771
  %v836 = vrsqrt.pop %v772
  %v837 = vrsqrt.pop %v773
  %v838 = vrsqrt.pop %v774
  %v839 = vrsqrt.pop %v775
  %v840 = vrsqrt.pop %v776
  %v841 = vrsqrt.pop %v777
  %v842 = vrsqrt.pop %v778
  %v843 = vrsqrt.pop %v779
  %v844 = vrsqrt.pop %v780
  %v845 = vrsqrt.pop %v781
  %v846 = vrsqrt.pop %v782
  %v847 = vrsqrt.pop %v783
  %v848 = vmul.f32 %v336, %v784
  %v849 = vmul.f32 %v337, %v785
  %v850 = vmul.f32 %v338, %v786
  %v851 = vmul.f32 %v339, %v787
  %v852 = vmul.f32 %v340, %v788
  %v853 = vmul.f32 %v341, %v789
  %v854 = vmul.f32 %v342, %v790
  %v855 = vmul.f32 %v343, %v791
  %v856 = vmul.f32 %v344, %v792
  %v857 = vmul.f32 %v345, %v793
  %v858 = vmul.f32 %v346, %v794
  %v859 = vmul.f32 %v347, %v795
  %v860 = vmul.f32 %v348, %v796
  %v861 = vmul.f32 %v349, %v797
  %v862 = vmul.f32 %v350, %v798
  %v863 = vmul.f32 %v351, %v799
  %v864 = vmul.f32 %v352, %v800
  %v865 = vmul.f32 %v353, %v801
  %v866 = vmul.f32 %v354, %v802
  %v867 = vmul.f32 %v355, %v803
  %v868 = vmul.f32 %v356, %v804
  %v869 = vmul.f32 %v357, %v805
  %v870 = vmul.f32 %v358, %v806
  %v871 = vmul.f32 %v359, %v807
  %v872 = vmul.f32 %v360, %v808
  %v873 = vmul.f32 %v361, %v809
  %v874 = vmul.f32 %v362, %v810
  %v875 = vmul.f32 %v363, %v811
  %v876 = vmul.f32 %v364, %v812
  %v877 = vmul.f32 %v365, %v813
  %v878 = vmul.f32 %v366, %v814
  %v879 = vmul.f32 %v367, %v815
  %v880 = vmul.f32 %v368, %v816
  %v881 = vmul.f32 %v369, %v817
  %v882 = vmul.f32 %v370, %v818
  %v883 = vmul.f32 %v371, %v819
  %v884 = vmul.f32 %v372, %v820
  %v885 = vmul.f32 %v373, %v821
  %v886 = vmul.f32 %v374, %v822
  %v887 = vmul.f32 %v375, %v823
  %v888 = vmul.f32 %v376, %v824
  %v889 = vmul.f32 %v377, %v825
  %v890 = vmul.f32 %v378, %v826
  %v891 = vmul.f32 %v379, %v827
  %v892 = vmul.f32 %v380, %v828
  %v893 = vmul.f32 %v381, %v829
  %v894 = vmul.f32 %v382, %v830
  %v895 = vmul.f32 %v383, %v831
  %v896 = vmul.f32 %v384, %v832
  %v897 = vmul.f32 %v385, %v833
  %v898 = vmul.f32 %v386, %v834
  %v899 = vmul.f32 %v387, %v835
  %v900 = vmul.f32 %v388, %v836
  %v901 = vmul.f32 %v389, %v837
  %v902 = vmul.f32 %v390, %v838
  %v903 = vmul.f32 %v391, %v839
  %v904 = vmul.f32 %v392, %v840
  %v905 = vmul.f32 %v393, %v841
  %v906 = vmul.f32 %v394, %v842
  %v907 = vmul.f32 %v395, %v843
  %v908 = vmul.f32 %v396, %v844
  %v909 = vmul.f32 %v397, %v845
  %v910 = vmul.f32 %v398, %v846
  %v911 = vmul.f32 %v399, %v847
  %v912 = vld [vmem:[%s1] sm:$0x1]
  %v914 = vlaneseq
  %v915 = vshrl.u32 %v914, 7
  %v916 = vsub.s32 0, %v915
  %v917 = vrot.slane %v912, %v916
  %v919 = vmul.f32 %v848, %v917
  %v920 = vmul.f32 %v849, %v917
  %v921 = vmul.f32 %v850, %v917
  %v922 = vmul.f32 %v851, %v917
  %v923 = vmul.f32 %v852, %v917
  %v924 = vmul.f32 %v853, %v917
  %v925 = vmul.f32 %v854, %v917
  %v926 = vmul.f32 %v855, %v917
  %v927 = vmul.f32 %v856, %v917
  %v928 = vmul.f32 %v857, %v917
  %v929 = vmul.f32 %v858, %v917
  %v930 = vmul.f32 %v859, %v917
  %v931 = vmul.f32 %v860, %v917
  %v932 = vmul.f32 %v861, %v917
  %v933 = vmul.f32 %v862, %v917
  %v934 = vmul.f32 %v863, %v917
  %v935 = vmul.f32 %v864, %v917
  %v936 = vmul.f32 %v865, %v917
  %v937 = vmul.f32 %v866, %v917
  %v938 = vmul.f32 %v867, %v917
  %v939 = vmul.f32 %v868, %v917
  %v940 = vmul.f32 %v869, %v917
  %v941 = vmul.f32 %v870, %v917
  %v942 = vmul.f32 %v871, %v917
  %v943 = vmul.f32 %v872, %v917
  %v944 = vmul.f32 %v873, %v917
  %v945 = vmul.f32 %v874, %v917
  %v946 = vmul.f32 %v875, %v917
  %v947 = vmul.f32 %v876, %v917
  %v948 = vmul.f32 %v877, %v917
  %v949 = vmul.f32 %v878, %v917
  %v950 = vmul.f32 %v879, %v917
  %v951 = vmul.f32 %v880, %v917
  %v952 = vmul.f32 %v881, %v917
  %v953 = vmul.f32 %v882, %v917
  %v954 = vmul.f32 %v883, %v917
  %v955 = vmul.f32 %v884, %v917
  %v956 = vmul.f32 %v885, %v917
  %v957 = vmul.f32 %v886, %v917
  %v958 = vmul.f32 %v887, %v917
  %v959 = vmul.f32 %v888, %v917
  %v960 = vmul.f32 %v889, %v917
  %v961 = vmul.f32 %v890, %v917
  %v962 = vmul.f32 %v891, %v917
  %v963 = vmul.f32 %v892, %v917
  %v964 = vmul.f32 %v893, %v917
  %v965 = vmul.f32 %v894, %v917
  %v966 = vmul.f32 %v895, %v917
  %v967 = vmul.f32 %v896, %v917
  %v968 = vmul.f32 %v897, %v917
  %v969 = vmul.f32 %v898, %v917
  %v970 = vmul.f32 %v899, %v917
  %v971 = vmul.f32 %v900, %v917
  %v972 = vmul.f32 %v901, %v917
  %v973 = vmul.f32 %v902, %v917
  %v974 = vmul.f32 %v903, %v917
  %v975 = vmul.f32 %v904, %v917
  %v976 = vmul.f32 %v905, %v917
  %v977 = vmul.f32 %v906, %v917
  %v978 = vmul.f32 %v907, %v917
  %v979 = vmul.f32 %v908, %v917
  %v980 = vmul.f32 %v909, %v917
  %v981 = vmul.f32 %v910, %v917
  %v982 = vmul.f32 %v911, %v917
  %v983 = vld [vmem:[%s2] sm:$0x1]
  %v985 = vlaneseq
  %v986 = vshrl.u32 %v985, 7
  %v987 = vsub.s32 0, %v986
  %v988 = vrot.slane %v983, %v987
  %v990 = vadd.f32 %v919, %v988
  %v991 = vadd.f32 %v920, %v988
  %v992 = vadd.f32 %v921, %v988
  %v993 = vadd.f32 %v922, %v988
  %v994 = vadd.f32 %v923, %v988
  %v995 = vadd.f32 %v924, %v988
  %v996 = vadd.f32 %v925, %v988
  %v997 = vadd.f32 %v926, %v988
  %v998 = vadd.f32 %v927, %v988
  %v999 = vadd.f32 %v928, %v988
  %v1000 = vadd.f32 %v929, %v988
  %v1001 = vadd.f32 %v930, %v988
  %v1002 = vadd.f32 %v931, %v988
  %v1003 = vadd.f32 %v932, %v988
  %v1004 = vadd.f32 %v933, %v988
  %v1005 = vadd.f32 %v934, %v988
  %v1006 = vadd.f32 %v935, %v988
  %v1007 = vadd.f32 %v936, %v988
  %v1008 = vadd.f32 %v937, %v988
  %v1009 = vadd.f32 %v938, %v988
  %v1010 = vadd.f32 %v939, %v988
  %v1011 = vadd.f32 %v940, %v988
  %v1012 = vadd.f32 %v941, %v988
  %v1013 = vadd.f32 %v942, %v988
  %v1014 = vadd.f32 %v943, %v988
  %v1015 = vadd.f32 %v944, %v988
  %v1016 = vadd.f32 %v945, %v988
  %v1017 = vadd.f32 %v946, %v988
  %v1018 = vadd.f32 %v947, %v988
  %v1019 = vadd.f32 %v948, %v988
  %v1020 = vadd.f32 %v949, %v988
  %v1021 = vadd.f32 %v950, %v988
  %v1022 = vadd.f32 %v951, %v988
  %v1023 = vadd.f32 %v952, %v988
  %v1024 = vadd.f32 %v953, %v988
  %v1025 = vadd.f32 %v954, %v988
  %v1026 = vadd.f32 %v955, %v988
  %v1027 = vadd.f32 %v956, %v988
  %v1028 = vadd.f32 %v957, %v988
  %v1029 = vadd.f32 %v958, %v988
  %v1030 = vadd.f32 %v959, %v988
  %v1031 = vadd.f32 %v960, %v988
  %v1032 = vadd.f32 %v961, %v988
  %v1033 = vadd.f32 %v962, %v988
  %v1034 = vadd.f32 %v963, %v988
  %v1035 = vadd.f32 %v964, %v988
  %v1036 = vadd.f32 %v965, %v988
  %v1037 = vadd.f32 %v966, %v988
  %v1038 = vadd.f32 %v967, %v988
  %v1039 = vadd.f32 %v968, %v988
  %v1040 = vadd.f32 %v969, %v988
  %v1041 = vadd.f32 %v970, %v988
  %v1042 = vadd.f32 %v971, %v988
  %v1043 = vadd.f32 %v972, %v988
  %v1044 = vadd.f32 %v973, %v988
  %v1045 = vadd.f32 %v974, %v988
  %v1046 = vadd.f32 %v975, %v988
  %v1047 = vadd.f32 %v976, %v988
  %v1048 = vadd.f32 %v977, %v988
  %v1049 = vadd.f32 %v978, %v988
  %v1050 = vadd.f32 %v979, %v988
  %v1051 = vadd.f32 %v980, %v988
  %v1052 = vadd.f32 %v981, %v988
  %v1053 = vadd.f32 %v982, %v988
  %1054 = vst.msk [vmem:[%s3] sm:$0xff] %vm78, %v990
  %1055 = vst.msk [vmem:[%s3 + $0x8] sm:$0xff] %vm78, %v991
  %1056 = vst.msk [vmem:[%s3 + $0x10] sm:$0xff] %vm78, %v992
  %1057 = vst.msk [vmem:[%s3 + $0x18] sm:$0xff] %vm78, %v993
  %1058 = vst.msk [vmem:[%s3 + $0x20] sm:$0xff] %vm78, %v994
  %1059 = vst.msk [vmem:[%s3 + $0x28] sm:$0xff] %vm78, %v995
  %1060 = vst.msk [vmem:[%s3 + $0x30] sm:$0xff] %vm78, %v996
  %1061 = vst.msk [vmem:[%s3 + $0x38] sm:$0xff] %vm78, %v997
  %1062 = vst.msk [vmem:[%s3 + $0x40] sm:$0xff] %vm78, %v998
  %1063 = vst.msk [vmem:[%s3 + $0x48] sm:$0xff] %vm78, %v999
  %1064 = vst.msk [vmem:[%s3 + $0x50] sm:$0xff] %vm78, %v1000
  %1065 = vst.msk [vmem:[%s3 + $0x58] sm:$0xff] %vm78, %v1001
  %1066 = vst.msk [vmem:[%s3 + $0x60] sm:$0xff] %vm78, %v1002
  %1067 = vst.msk [vmem:[%s3 + $0x68] sm:$0xff] %vm78, %v1003
  %1068 = vst.msk [vmem:[%s3 + $0x70] sm:$0xff] %vm78, %v1004
  %1069 = vst.msk [vmem:[%s3 + $0x78] sm:$0xff] %vm78, %v1005
  %1070 = vst.msk [vmem:[%s3 + $0x80] sm:$0xff] %vm78, %v1006
  %1071 = vst.msk [vmem:[%s3 + $0x88] sm:$0xff] %vm78, %v1007
  %1072 = vst.msk [vmem:[%s3 + $0x90] sm:$0xff] %vm78, %v1008
  %1073 = vst.msk [vmem:[%s3 + $0x98] sm:$0xff] %vm78, %v1009
  %1074 = vst.msk [vmem:[%s3 + $0xa0] sm:$0xff] %vm78, %v1010
  %1075 = vst.msk [vmem:[%s3 + $0xa8] sm:$0xff] %vm78, %v1011
  %1076 = vst.msk [vmem:[%s3 + $0xb0] sm:$0xff] %vm78, %v1012
  %1077 = vst.msk [vmem:[%s3 + $0xb8] sm:$0xff] %vm78, %v1013
  %1078 = vst.msk [vmem:[%s3 + $0xc0] sm:$0xff] %vm78, %v1014
  %1079 = vst.msk [vmem:[%s3 + $0xc8] sm:$0xff] %vm78, %v1015
  %1080 = vst.msk [vmem:[%s3 + $0xd0] sm:$0xff] %vm78, %v1016
  %1081 = vst.msk [vmem:[%s3 + $0xd8] sm:$0xff] %vm78, %v1017
  %1082 = vst.msk [vmem:[%s3 + $0xe0] sm:$0xff] %vm78, %v1018
  %1083 = vst.msk [vmem:[%s3 + $0xe8] sm:$0xff] %vm78, %v1019
  %1084 = vst.msk [vmem:[%s3 + $0xf0] sm:$0xff] %vm78, %v1020
  %1085 = vst.msk [vmem:[%s3 + $0xf8] sm:$0xff] %vm78, %v1021
  %1086 = vst.msk [vmem:[%s3 + $0x100] sm:$0xff] %vm78, %v1022
  %1087 = vst.msk [vmem:[%s3 + $0x108] sm:$0xff] %vm78, %v1023
  %1088 = vst.msk [vmem:[%s3 + $0x110] sm:$0xff] %vm78, %v1024
  %1089 = vst.msk [vmem:[%s3 + $0x118] sm:$0xff] %vm78, %v1025
  %1090 = vst.msk [vmem:[%s3 + $0x120] sm:$0xff] %vm78, %v1026
  %1091 = vst.msk [vmem:[%s3 + $0x128] sm:$0xff] %vm78, %v1027
  %1092 = vst.msk [vmem:[%s3 + $0x130] sm:$0xff] %vm78, %v1028
  %1093 = vst.msk [vmem:[%s3 + $0x138] sm:$0xff] %vm78, %v1029
  %1094 = vst.msk [vmem:[%s3 + $0x140] sm:$0xff] %vm78, %v1030
  %1095 = vst.msk [vmem:[%s3 + $0x148] sm:$0xff] %vm78, %v1031
  %1096 = vst.msk [vmem:[%s3 + $0x150] sm:$0xff] %vm78, %v1032
  %1097 = vst.msk [vmem:[%s3 + $0x158] sm:$0xff] %vm78, %v1033
  %1098 = vst.msk [vmem:[%s3 + $0x160] sm:$0xff] %vm78, %v1034
  %1099 = vst.msk [vmem:[%s3 + $0x168] sm:$0xff] %vm78, %v1035
  %1100 = vst.msk [vmem:[%s3 + $0x170] sm:$0xff] %vm78, %v1036
  %1101 = vst.msk [vmem:[%s3 + $0x178] sm:$0xff] %vm78, %v1037
  %1102 = vst.msk [vmem:[%s3 + $0x180] sm:$0xff] %vm78, %v1038
  %1103 = vst.msk [vmem:[%s3 + $0x188] sm:$0xff] %vm78, %v1039
  %1104 = vst.msk [vmem:[%s3 + $0x190] sm:$0xff] %vm78, %v1040
  %1105 = vst.msk [vmem:[%s3 + $0x198] sm:$0xff] %vm78, %v1041
  %1106 = vst.msk [vmem:[%s3 + $0x1a0] sm:$0xff] %vm78, %v1042
  %1107 = vst.msk [vmem:[%s3 + $0x1a8] sm:$0xff] %vm78, %v1043
  %1108 = vst.msk [vmem:[%s3 + $0x1b0] sm:$0xff] %vm78, %v1044
  %1109 = vst.msk [vmem:[%s3 + $0x1b8] sm:$0xff] %vm78, %v1045
  %1110 = vst.msk [vmem:[%s3 + $0x1c0] sm:$0xff] %vm78, %v1046
  %1111 = vst.msk [vmem:[%s3 + $0x1c8] sm:$0xff] %vm78, %v1047
  %1112 = vst.msk [vmem:[%s3 + $0x1d0] sm:$0xff] %vm78, %v1048
  %1113 = vst.msk [vmem:[%s3 + $0x1d8] sm:$0xff] %vm78, %v1049
  %1114 = vst.msk [vmem:[%s3 + $0x1e0] sm:$0xff] %vm78, %v1050
  %1115 = vst.msk [vmem:[%s3 + $0x1e8] sm:$0xff] %vm78, %v1051
  %1116 = vst.msk [vmem:[%s3 + $0x1f0] sm:$0xff] %vm78, %v1052
  %1117 = vst.msk [vmem:[%s3 + $0x1f8] sm:$0xff] %vm78, %v1053
  // Predicated region
  $region14: #{tpu_custom_call.1} parent=0 // pred_check
    _
  $region15: #{tpu_custom_call.1} parent=0 // pred_check_branch
    %1119 = sbr.rel (0) target = $region17
  $region16: #{tpu_custom_call.1} parent=0 // pred_region
    _
  $region17: #{tpu_custom_call.1} parent=0 // pred_fallthru
    _
  // Predicated region
  $region18: #{tpu_custom_call.1} parent=0 // pred_check
    _
  $region19: #{tpu_custom_call.1} parent=0 // pred_check_branch
    %1121 = sbr.rel (0) target = $region21
  $region20: #{tpu_custom_call.1} parent=0 // pred_region
    _
  $region21: #{tpu_custom_call.1} parent=0 // pred_fallthru
    _

</llo_original>
